<compile_context>
chip_gen: v7x
topology: tpu7x:2x2x1
jax: 0.10.0
libtpu: 0.0.40
codegen_flags: <defaults>
</compile_context>

<pallas_src>
import functools

import jax
import jax.numpy as jnp
from jax import lax
from jax.experimental import pallas as pl
from jax.experimental.pallas import tpu as pltpu


def _lstm_fc_kernel(x_ref, p_ref, out_ref, *, B, T, H, O):
    TB, I = x_ref.shape
    G = 4 * H

    # ---- Static slices of the packed parameter slab (no per-param DMA). ----
    w_ih = p_ref[0:I, :]                          # (I, G)  = W_ih^T
    w_hh = p_ref[I:I + H, :]                      # (H, G)  = W_hh^T
    bias = p_ref[I + H:I + H + 1, :]              # (1, G)  = b_ih + b_hh
    fc_w = p_ref[I + H + 1:I + H + 1 + O, :]      # (O, G)  lanes [0:H] = W_fc
    fc_b = p_ref[I + H + 1 + O:I + H + 2 + O, :]  # (1, G)  lanes [0:O] = b_fc

    # ---- Non-recurrent pre-pass: input projection for ALL timesteps at once. ----
    # x is already ordered by timestep, so row block [t*B:(t+1)*B] is step t.
    x_proj = jnp.dot(x_ref[...], w_ih,
                     preferred_element_type=jnp.float32) + bias   # (T*B, G)

    # Lane mask selecting the g-gate block (tanh); other gates use sigmoid,
    # rewritten as sigmoid(x) = 0.5*(1 + tanh(x/2)) so ONE tanh covers all gates.
    lane = lax.broadcasted_iota(jnp.int32, (B, G), 1)
    g_mask = (lane >= 2 * H) & (lane < 3 * H)
    pre_scale = jnp.where(g_mask, 1.0, 0.5).astype(jnp.float32)   # hoisted

    h = jnp.zeros((B, H), jnp.float32)
    c = jnp.zeros((B, H), jnp.float32)

    # Serial recurrence; statically unrolled (T=8 is small & static at trace time).
    # If T grew past ~16-32 this should become lax.fori_loop(..., unroll=k).
    for t in range(T):
        gates = x_proj[t * B:(t + 1) * B, :] + jnp.dot(
            h, w_hh, preferred_element_type=jnp.float32)          # (B, 4H)
        tg = jnp.tanh(gates * pre_scale)                          # single EUP op
        act = jnp.where(g_mask, tg, 0.5 * tg + 0.5)
        i_g = act[:, 0 * H:1 * H]
        f_g = act[:, 1 * H:2 * H]
        g_g = act[:, 2 * H:3 * H]
        o_g = act[:, 3 * H:4 * H]
        c = f_g * c + i_g * g_g
        h = o_g * jnp.tanh(c)

    # Dropout -> identity (eval).  Final FC on the last hidden state.
    if O == 1:
        # VPU multiply + lane reduction: cheaper than a 1-column MXU matmul.
        w_row = fc_w[:, 0:H]                                      # (1, H)
        out = jnp.sum(h * w_row, axis=-1, keepdims=True) + fc_b[:, 0:1]
    else:
        out = lax.dot_general(h, fc_w[:, 0:H], (((1,), (1,)), ((), ())),
                              preferred_element_type=jnp.float32) + fc_b[:, 0:O]
    out_ref[...] = out


def lstm_model_forward(x, w_ih, w_hh, b_ih, b_hh, w_fc, b_fc):
    """x: (B, T, I) float32 (batch_first).  Weights follow PyTorch shapes:
       w_ih: (4H, I), w_hh: (4H, H), b_ih/b_hh: (4H,), w_fc: (O, H), b_fc: (O,)."""
    B, T, I = x.shape
    G = w_ih.shape[0]
    H = G // 4
    O = w_fc.shape[0]
    f32 = jnp.float32

    # Order x by timestep in the wrapper so the in-kernel per-step slice is a
    # contiguous sublane block and no in-kernel reshape/relayout is needed.
    x_tb = jnp.transpose(x.astype(f32), (1, 0, 2)).reshape(T * B, I)   # (T*B, I)

    # Pack ALL parameters into one lane-dense slab: fewer DMAs dominate at this size.
    w_ih_t = w_ih.T.astype(f32)                                        # (I, G)
    w_hh_t = w_hh.T.astype(f32)                                        # (H, G)
    bias = (b_ih + b_hh).astype(f32).reshape(1, G)                     # (1, G)
    fc_w = jnp.zeros((O, G), f32).at[:, :H].set(w_fc.astype(f32))      # (O, G)
    fc_b = jnp.zeros((1, G), f32).at[0, :O].set(b_fc.astype(f32))      # (1, G)
    params = jnp.concatenate([w_ih_t, w_hh_t, bias, fc_w, fc_b], axis=0)

    kernel = functools.partial(_lstm_fc_kernel, B=B, T=T, H=H, O=O)

    out = pl.pallas_call(
        kernel,
        out_shape=jax.ShapeDtypeStruct((B, O), f32),
        in_specs=[
            pl.BlockSpec(memory_space=pltpu.MemorySpace.VMEM),   # x (T*B, I)
            pl.BlockSpec(memory_space=pltpu.MemorySpace.VMEM),   # packed params
        ],
        out_specs=pl.BlockSpec(memory_space=pltpu.MemorySpace.VMEM),
    )(x_tb, params)
    return out


def lstm_model_reference(x, w_ih, w_hh, b_ih, b_hh, w_fc, b_fc):
    """Pure-JAX reference matching PyTorch LSTM (eval-mode dropout)."""
    B, T, I = x.shape
    H = w_hh.shape[1]

    def step(carry, x_t):
        h, c = carry
        gates = x_t @ w_ih.T + h @ w_hh.T + b_ih + b_hh
        i_g = jax.nn.sigmoid(gates[:, 0 * H:1 * H])
        f_g = jax.nn.sigmoid(gates[:, 1 * H:2 * H])
        g_g = jnp.tanh(gates[:, 2 * H:3 * H])
        o_g = jax.nn.sigmoid(gates[:, 3 * H:4 * H])
        c = f_g * c + i_g * g_g
        h = o_g * jnp.tanh(c)
        return (h, c), None

    h0 = jnp.zeros((B, H), jnp.float32)
    c0 = jnp.zeros((B, H), jnp.float32)
    (h_last, _), _ = lax.scan(step, (h0, c0), jnp.transpose(x, (1, 0, 2)))
    return h_last @ w_fc.T + b_fc


if __name__ == "__main__":
    # Small shapes consistent with the module's forward.
    B, T, I, H, O = 2, 8, 24, 32, 1

    key = jax.random.PRNGKey(0)
    keys = jax.random.split(key, 8)
    bound = 1.0 / jnp.sqrt(H)

    x = jax.random.normal(keys[0], (B, T, I), jnp.float32)
    w_ih = jax.random.uniform(keys[1], (4 * H, I), jnp.float32, -bound, bound)
    w_hh = jax.random.uniform(keys[2], (4 * H, H), jnp.float32, -bound, bound)
    b_ih = jax.random.uniform(keys[3], (4 * H,), jnp.float32, -bound, bound)
    b_hh = jax.random.uniform(keys[4], (4 * H,), jnp.float32, -bound, bound)
    w_fc = jax.random.uniform(keys[5], (O, H), jnp.float32, -bound, bound)
    b_fc = jax.random.uniform(keys[6], (O,), jnp.float32, -bound, bound)

    out = lstm_model_forward(x, w_ih, w_hh, b_ih, b_hh, w_fc, b_fc)
    out = jax.block_until_ready(out)

    ref = lstm_model_reference(x, w_ih, w_hh, b_ih, b_hh, w_fc, b_fc)
    assert out.shape == (B, O), out.shape
    assert jnp.allclose(out, ref, atol=1e-5, rtol=1e-5), (out, ref)

    print("KERNEL_OK")
</pallas_src>

<mosaic_0001>
module attributes {stable_mosaic.version = 11 : i64} {
  func.func @_lstm_fc_kernel(%arg0: memref<16x24xf32, #tpu.memory_space<vmem>>, %arg1: memref<59x128xf32, #tpu.memory_space<vmem>>, %arg2: memref<2x1xf32, #tpu.memory_space<vmem>>) attributes {dimension_semantics = [], scalar_prefetch = 0 : i64, scratch_operands = 0 : i64, tpu.core_type = #tpu.core_type<tc>} {
    %c0 = arith.constant 0 : index
    %c0_0 = arith.constant 0 : index
    %0 = vector.load %arg1[%c0, %c0_0] : memref<59x128xf32, #tpu.memory_space<vmem>>, vector<24x128xf32>
    %c24 = arith.constant 24 : index
    %c0_1 = arith.constant 0 : index
    %1 = vector.load %arg1[%c24, %c0_1] : memref<59x128xf32, #tpu.memory_space<vmem>>, vector<32x128xf32>
    %c56 = arith.constant 56 : index
    %c0_2 = arith.constant 0 : index
    %2 = vector.load %arg1[%c56, %c0_2] : memref<59x128xf32, #tpu.memory_space<vmem>>, vector<1x128xf32>
    %c57 = arith.constant 57 : index
    %c0_3 = arith.constant 0 : index
    %3 = vector.load %arg1[%c57, %c0_3] : memref<59x128xf32, #tpu.memory_space<vmem>>, vector<1x128xf32>
    %c58 = arith.constant 58 : index
    %c0_4 = arith.constant 0 : index
    %4 = vector.load %arg1[%c58, %c0_4] : memref<59x128xf32, #tpu.memory_space<vmem>>, vector<1x128xf32>
    %c0_5 = arith.constant 0 : index
    %c0_6 = arith.constant 0 : index
    %5 = vector.load %arg0[%c0_5, %c0_6] : memref<16x24xf32, #tpu.memory_space<vmem>>, vector<16x24xf32>
    %cst = arith.constant dense<0.000000e+00> : vector<16x128xf32>
    %6 = tpu.matmul %5, %0, %cst {dimension_numbers = #tpu.dot_dimension_numbers<[1], [0], [0], [1], [0, 0, 1, 1], [], []>} : vector<16x24xf32>, vector<24x128xf32>, vector<16x128xf32> -> vector<16x128xf32>
    %7 = vector.broadcast %2 : vector<1x128xf32> to vector<16x128xf32>
    %8 = arith.addf %6, %7 : vector<16x128xf32>
    %9 = tpu.iota {dimensions = array<i32: 1>} : vector<2x128xi32>
    %c64_i32 = arith.constant 64 : i32
    %10 = vector.broadcast %c64_i32 : i32 to vector<2x128xi32>
    %11 = arith.cmpi sge, %9, %10 : vector<2x128xi32>
    %c96_i32 = arith.constant 96 : i32
    %12 = vector.broadcast %c96_i32 : i32 to vector<2x128xi32>
    %13 = arith.cmpi slt, %9, %12 : vector<2x128xi32>
    %14 = arith.andi %11, %13 : vector<2x128xi1>
    %cst_7 = arith.constant 1.000000e+00 : f32
    %cst_8 = arith.constant 5.000000e-01 : f32
    %15 = vector.broadcast %cst_7 : f32 to vector<2x128xf32>
    %16 = vector.broadcast %cst_8 : f32 to vector<2x128xf32>
    %17 = arith.select %14, %15, %16 : vector<2x128xi1>, vector<2x128xf32>
    %cst_9 = arith.constant 0.000000e+00 : f32
    %18 = vector.broadcast %cst_9 : f32 to vector<2x32xf32>
    %cst_10 = arith.constant 0.000000e+00 : f32
    %19 = vector.broadcast %cst_10 : f32 to vector<2x32xf32>
    %20 = vector.extract_strided_slice %8 {offsets = [0, 0], sizes = [2, 128], strides = [1, 1]} : vector<16x128xf32> to vector<2x128xf32>
    %cst_11 = arith.constant dense<0.000000e+00> : vector<2x128xf32>
    %21 = tpu.matmul %18, %1, %cst_11 {dimension_numbers = #tpu.dot_dimension_numbers<[1], [0], [0], [1], [0, 0, 1, 1], [], []>} : vector<2x32xf32>, vector<32x128xf32>, vector<2x128xf32> -> vector<2x128xf32>
    %22 = arith.addf %20, %21 : vector<2x128xf32>
    %23 = arith.mulf %22, %17 : vector<2x128xf32>
    %24 = math.tanh %23 : vector<2x128xf32>
    %cst_12 = arith.constant 5.000000e-01 : f32
    %25 = vector.broadcast %cst_12 : f32 to vector<2x128xf32>
    %26 = arith.mulf %25, %24 : vector<2x128xf32>
    %cst_13 = arith.constant 5.000000e-01 : f32
    %27 = vector.broadcast %cst_13 : f32 to vector<2x128xf32>
    %28 = arith.addf %26, %27 : vector<2x128xf32>
    %29 = arith.select %14, %24, %28 : vector<2x128xi1>, vector<2x128xf32>
    %30 = vector.extract_strided_slice %29 {offsets = [0, 0], sizes = [2, 32], strides = [1, 1]} : vector<2x128xf32> to vector<2x32xf32>
    %31 = vector.extract_strided_slice %29 {offsets = [0, 32], sizes = [2, 32], strides = [1, 1]} : vector<2x128xf32> to vector<2x32xf32>
    %32 = vector.extract_strided_slice %29 {offsets = [0, 64], sizes = [2, 32], strides = [1, 1]} : vector<2x128xf32> to vector<2x32xf32>
    %33 = vector.extract_strided_slice %29 {offsets = [0, 96], sizes = [2, 32], strides = [1, 1]} : vector<2x128xf32> to vector<2x32xf32>
    %34 = arith.mulf %31, %19 : vector<2x32xf32>
    %35 = arith.mulf %30, %32 : vector<2x32xf32>
    %36 = arith.addf %34, %35 : vector<2x32xf32>
    %37 = math.tanh %36 : vector<2x32xf32>
    %38 = arith.mulf %33, %37 : vector<2x32xf32>
    %39 = vector.extract_strided_slice %8 {offsets = [2, 0], sizes = [2, 128], strides = [1, 1]} : vector<16x128xf32> to vector<2x128xf32>
    %cst_14 = arith.constant dense<0.000000e+00> : vector<2x128xf32>
    %40 = tpu.matmul %38, %1, %cst_14 {dimension_numbers = #tpu.dot_dimension_numbers<[1], [0], [0], [1], [0, 0, 1, 1], [], []>} : vector<2x32xf32>, vector<32x128xf32>, vector<2x128xf32> -> vector<2x128xf32>
    %41 = arith.addf %39, %40 : vector<2x128xf32>
    %42 = arith.mulf %41, %17 : vector<2x128xf32>
    %43 = math.tanh %42 : vector<2x128xf32>
    %cst_15 = arith.constant 5.000000e-01 : f32
    %44 = vector.broadcast %cst_15 : f32 to vector<2x128xf32>
    %45 = arith.mulf %44, %43 : vector<2x128xf32>
    %cst_16 = arith.constant 5.000000e-01 : f32
    %46 = vector.broadcast %cst_16 : f32 to vector<2x128xf32>
    %47 = arith.addf %45, %46 : vector<2x128xf32>
    %48 = arith.select %14, %43, %47 : vector<2x128xi1>, vector<2x128xf32>
    %49 = vector.extract_strided_slice %48 {offsets = [0, 0], sizes = [2, 32], strides = [1, 1]} : vector<2x128xf32> to vector<2x32xf32>
    %50 = vector.extract_strided_slice %48 {offsets = [0, 32], sizes = [2, 32], strides = [1, 1]} : vector<2x128xf32> to vector<2x32xf32>
    %51 = vector.extract_strided_slice %48 {offsets = [0, 64], sizes = [2, 32], strides = [1, 1]} : vector<2x128xf32> to vector<2x32xf32>
    %52 = vector.extract_strided_slice %48 {offsets = [0, 96], sizes = [2, 32], strides = [1, 1]} : vector<2x128xf32> to vector<2x32xf32>
    %53 = arith.mulf %50, %36 : vector<2x32xf32>
    %54 = arith.mulf %49, %51 : vector<2x32xf32>
    %55 = arith.addf %53, %54 : vector<2x32xf32>
    %56 = math.tanh %55 : vector<2x32xf32>
    %57 = arith.mulf %52, %56 : vector<2x32xf32>
    %58 = vector.extract_strided_slice %8 {offsets = [4, 0], sizes = [2, 128], strides = [1, 1]} : vector<16x128xf32> to vector<2x128xf32>
    %cst_17 = arith.constant dense<0.000000e+00> : vector<2x128xf32>
    %59 = tpu.matmul %57, %1, %cst_17 {dimension_numbers = #tpu.dot_dimension_numbers<[1], [0], [0], [1], [0, 0, 1, 1], [], []>} : vector<2x32xf32>, vector<32x128xf32>, vector<2x128xf32> -> vector<2x128xf32>
    %60 = arith.addf %58, %59 : vector<2x128xf32>
    %61 = arith.mulf %60, %17 : vector<2x128xf32>
    %62 = math.tanh %61 : vector<2x128xf32>
    %cst_18 = arith.constant 5.000000e-01 : f32
    %63 = vector.broadcast %cst_18 : f32 to vector<2x128xf32>
    %64 = arith.mulf %63, %62 : vector<2x128xf32>
    %cst_19 = arith.constant 5.000000e-01 : f32
    %65 = vector.broadcast %cst_19 : f32 to vector<2x128xf32>
    %66 = arith.addf %64, %65 : vector<2x128xf32>
    %67 = arith.select %14, %62, %66 : vector<2x128xi1>, vector<2x128xf32>
    %68 = vector.extract_strided_slice %67 {offsets = [0, 0], sizes = [2, 32], strides = [1, 1]} : vector<2x128xf32> to vector<2x32xf32>
    %69 = vector.extract_strided_slice %67 {offsets = [0, 32], sizes = [2, 32], strides = [1, 1]} : vector<2x128xf32> to vector<2x32xf32>
    %70 = vector.extract_strided_slice %67 {offsets = [0, 64], sizes = [2, 32], strides = [1, 1]} : vector<2x128xf32> to vector<2x32xf32>
    %71 = vector.extract_strided_slice %67 {offsets = [0, 96], sizes = [2, 32], strides = [1, 1]} : vector<2x128xf32> to vector<2x32xf32>
    %72 = arith.mulf %69, %55 : vector<2x32xf32>
    %73 = arith.mulf %68, %70 : vector<2x32xf32>
    %74 = arith.addf %72, %73 : vector<2x32xf32>
    %75 = math.tanh %74 : vector<2x32xf32>
    %76 = arith.mulf %71, %75 : vector<2x32xf32>
    %77 = vector.extract_strided_slice %8 {offsets = [6, 0], sizes = [2, 128], strides = [1, 1]} : vector<16x128xf32> to vector<2x128xf32>
    %cst_20 = arith.constant dense<0.000000e+00> : vector<2x128xf32>
    %78 = tpu.matmul %76, %1, %cst_20 {dimension_numbers = #tpu.dot_dimension_numbers<[1], [0], [0], [1], [0, 0, 1, 1], [], []>} : vector<2x32xf32>, vector<32x128xf32>, vector<2x128xf32> -> vector<2x128xf32>
    %79 = arith.addf %77, %78 : vector<2x128xf32>
    %80 = arith.mulf %79, %17 : vector<2x128xf32>
    %81 = math.tanh %80 : vector<2x128xf32>
    %cst_21 = arith.constant 5.000000e-01 : f32
    %82 = vector.broadcast %cst_21 : f32 to vector<2x128xf32>
    %83 = arith.mulf %82, %81 : vector<2x128xf32>
    %cst_22 = arith.constant 5.000000e-01 : f32
    %84 = vector.broadcast %cst_22 : f32 to vector<2x128xf32>
    %85 = arith.addf %83, %84 : vector<2x128xf32>
    %86 = arith.select %14, %81, %85 : vector<2x128xi1>, vector<2x128xf32>
    %87 = vector.extract_strided_slice %86 {offsets = [0, 0], sizes = [2, 32], strides = [1, 1]} : vector<2x128xf32> to vector<2x32xf32>
    %88 = vector.extract_strided_slice %86 {offsets = [0, 32], sizes = [2, 32], strides = [1, 1]} : vector<2x128xf32> to vector<2x32xf32>
    %89 = vector.extract_strided_slice %86 {offsets = [0, 64], sizes = [2, 32], strides = [1, 1]} : vector<2x128xf32> to vector<2x32xf32>
    %90 = vector.extract_strided_slice %86 {offsets = [0, 96], sizes = [2, 32], strides = [1, 1]} : vector<2x128xf32> to vector<2x32xf32>
    %91 = arith.mulf %88, %74 : vector<2x32xf32>
    %92 = arith.mulf %87, %89 : vector<2x32xf32>
    %93 = arith.addf %91, %92 : vector<2x32xf32>
    %94 = math.tanh %93 : vector<2x32xf32>
    %95 = arith.mulf %90, %94 : vector<2x32xf32>
    %96 = vector.extract_strided_slice %8 {offsets = [8, 0], sizes = [2, 128], strides = [1, 1]} : vector<16x128xf32> to vector<2x128xf32>
    %cst_23 = arith.constant dense<0.000000e+00> : vector<2x128xf32>
    %97 = tpu.matmul %95, %1, %cst_23 {dimension_numbers = #tpu.dot_dimension_numbers<[1], [0], [0], [1], [0, 0, 1, 1], [], []>} : vector<2x32xf32>, vector<32x128xf32>, vector<2x128xf32> -> vector<2x128xf32>
    %98 = arith.addf %96, %97 : vector<2x128xf32>
    %99 = arith.mulf %98, %17 : vector<2x128xf32>
    %100 = math.tanh %99 : vector<2x128xf32>
    %cst_24 = arith.constant 5.000000e-01 : f32
    %101 = vector.broadcast %cst_24 : f32 to vector<2x128xf32>
    %102 = arith.mulf %101, %100 : vector<2x128xf32>
    %cst_25 = arith.constant 5.000000e-01 : f32
    %103 = vector.broadcast %cst_25 : f32 to vector<2x128xf32>
    %104 = arith.addf %102, %103 : vector<2x128xf32>
    %105 = arith.select %14, %100, %104 : vector<2x128xi1>, vector<2x128xf32>
    %106 = vector.extract_strided_slice %105 {offsets = [0, 0], sizes = [2, 32], strides = [1, 1]} : vector<2x128xf32> to vector<2x32xf32>
    %107 = vector.extract_strided_slice %105 {offsets = [0, 32], sizes = [2, 32], strides = [1, 1]} : vector<2x128xf32> to vector<2x32xf32>
    %108 = vector.extract_strided_slice %105 {offsets = [0, 64], sizes = [2, 32], strides = [1, 1]} : vector<2x128xf32> to vector<2x32xf32>
    %109 = vector.extract_strided_slice %105 {offsets = [0, 96], sizes = [2, 32], strides = [1, 1]} : vector<2x128xf32> to vector<2x32xf32>
    %110 = arith.mulf %107, %93 : vector<2x32xf32>
    %111 = arith.mulf %106, %108 : vector<2x32xf32>
    %112 = arith.addf %110, %111 : vector<2x32xf32>
    %113 = math.tanh %112 : vector<2x32xf32>
    %114 = arith.mulf %109, %113 : vector<2x32xf32>
    %115 = vector.extract_strided_slice %8 {offsets = [10, 0], sizes = [2, 128], strides = [1, 1]} : vector<16x128xf32> to vector<2x128xf32>
    %cst_26 = arith.constant dense<0.000000e+00> : vector<2x128xf32>
    %116 = tpu.matmul %114, %1, %cst_26 {dimension_numbers = #tpu.dot_dimension_numbers<[1], [0], [0], [1], [0, 0, 1, 1], [], []>} : vector<2x32xf32>, vector<32x128xf32>, vector<2x128xf32> -> vector<2x128xf32>
    %117 = arith.addf %115, %116 : vector<2x128xf32>
    %118 = arith.mulf %117, %17 : vector<2x128xf32>
    %119 = math.tanh %118 : vector<2x128xf32>
    %cst_27 = arith.constant 5.000000e-01 : f32
    %120 = vector.broadcast %cst_27 : f32 to vector<2x128xf32>
    %121 = arith.mulf %120, %119 : vector<2x128xf32>
    %cst_28 = arith.constant 5.000000e-01 : f32
    %122 = vector.broadcast %cst_28 : f32 to vector<2x128xf32>
    %123 = arith.addf %121, %122 : vector<2x128xf32>
    %124 = arith.select %14, %119, %123 : vector<2x128xi1>, vector<2x128xf32>
    %125 = vector.extract_strided_slice %124 {offsets = [0, 0], sizes = [2, 32], strides = [1, 1]} : vector<2x128xf32> to vector<2x32xf32>
    %126 = vector.extract_strided_slice %124 {offsets = [0, 32], sizes = [2, 32], strides = [1, 1]} : vector<2x128xf32> to vector<2x32xf32>
    %127 = vector.extract_strided_slice %124 {offsets = [0, 64], sizes = [2, 32], strides = [1, 1]} : vector<2x128xf32> to vector<2x32xf32>
    %128 = vector.extract_strided_slice %124 {offsets = [0, 96], sizes = [2, 32], strides = [1, 1]} : vector<2x128xf32> to vector<2x32xf32>
    %129 = arith.mulf %126, %112 : vector<2x32xf32>
    %130 = arith.mulf %125, %127 : vector<2x32xf32>
    %131 = arith.addf %129, %130 : vector<2x32xf32>
    %132 = math.tanh %131 : vector<2x32xf32>
    %133 = arith.mulf %128, %132 : vector<2x32xf32>
    %134 = vector.extract_strided_slice %8 {offsets = [12, 0], sizes = [2, 128], strides = [1, 1]} : vector<16x128xf32> to vector<2x128xf32>
    %cst_29 = arith.constant dense<0.000000e+00> : vector<2x128xf32>
    %135 = tpu.matmul %133, %1, %cst_29 {dimension_numbers = #tpu.dot_dimension_numbers<[1], [0], [0], [1], [0, 0, 1, 1], [], []>} : vector<2x32xf32>, vector<32x128xf32>, vector<2x128xf32> -> vector<2x128xf32>
    %136 = arith.addf %134, %135 : vector<2x128xf32>
    %137 = arith.mulf %136, %17 : vector<2x128xf32>
    %138 = math.tanh %137 : vector<2x128xf32>
    %cst_30 = arith.constant 5.000000e-01 : f32
    %139 = vector.broadcast %cst_30 : f32 to vector<2x128xf32>
    %140 = arith.mulf %139, %138 : vector<2x128xf32>
    %cst_31 = arith.constant 5.000000e-01 : f32
    %141 = vector.broadcast %cst_31 : f32 to vector<2x128xf32>
    %142 = arith.addf %140, %141 : vector<2x128xf32>
    %143 = arith.select %14, %138, %142 : vector<2x128xi1>, vector<2x128xf32>
    %144 = vector.extract_strided_slice %143 {offsets = [0, 0], sizes = [2, 32], strides = [1, 1]} : vector<2x128xf32> to vector<2x32xf32>
    %145 = vector.extract_strided_slice %143 {offsets = [0, 32], sizes = [2, 32], strides = [1, 1]} : vector<2x128xf32> to vector<2x32xf32>
    %146 = vector.extract_strided_slice %143 {offsets = [0, 64], sizes = [2, 32], strides = [1, 1]} : vector<2x128xf32> to vector<2x32xf32>
    %147 = vector.extract_strided_slice %143 {offsets = [0, 96], sizes = [2, 32], strides = [1, 1]} : vector<2x128xf32> to vector<2x32xf32>
    %148 = arith.mulf %145, %131 : vector<2x32xf32>
    %149 = arith.mulf %144, %146 : vector<2x32xf32>
    %150 = arith.addf %148, %149 : vector<2x32xf32>
    %151 = math.tanh %150 : vector<2x32xf32>
    %152 = arith.mulf %147, %151 : vector<2x32xf32>
    %153 = vector.extract_strided_slice %8 {offsets = [14, 0], sizes = [2, 128], strides = [1, 1]} : vector<16x128xf32> to vector<2x128xf32>
    %cst_32 = arith.constant dense<0.000000e+00> : vector<2x128xf32>
    %154 = tpu.matmul %152, %1, %cst_32 {dimension_numbers = #tpu.dot_dimension_numbers<[1], [0], [0], [1], [0, 0, 1, 1], [], []>} : vector<2x32xf32>, vector<32x128xf32>, vector<2x128xf32> -> vector<2x128xf32>
    %155 = arith.addf %153, %154 : vector<2x128xf32>
    %156 = arith.mulf %155, %17 : vector<2x128xf32>
    %157 = math.tanh %156 : vector<2x128xf32>
    %cst_33 = arith.constant 5.000000e-01 : f32
    %158 = vector.broadcast %cst_33 : f32 to vector<2x128xf32>
    %159 = arith.mulf %158, %157 : vector<2x128xf32>
    %cst_34 = arith.constant 5.000000e-01 : f32
    %160 = vector.broadcast %cst_34 : f32 to vector<2x128xf32>
    %161 = arith.addf %159, %160 : vector<2x128xf32>
    %162 = arith.select %14, %157, %161 : vector<2x128xi1>, vector<2x128xf32>
    %163 = vector.extract_strided_slice %162 {offsets = [0, 0], sizes = [2, 32], strides = [1, 1]} : vector<2x128xf32> to vector<2x32xf32>
    %164 = vector.extract_strided_slice %162 {offsets = [0, 32], sizes = [2, 32], strides = [1, 1]} : vector<2x128xf32> to vector<2x32xf32>
    %165 = vector.extract_strided_slice %162 {offsets = [0, 64], sizes = [2, 32], strides = [1, 1]} : vector<2x128xf32> to vector<2x32xf32>
    %166 = vector.extract_strided_slice %162 {offsets = [0, 96], sizes = [2, 32], strides = [1, 1]} : vector<2x128xf32> to vector<2x32xf32>
    %167 = arith.mulf %164, %150 : vector<2x32xf32>
    %168 = arith.mulf %163, %165 : vector<2x32xf32>
    %169 = arith.addf %167, %168 : vector<2x32xf32>
    %170 = math.tanh %169 : vector<2x32xf32>
    %171 = arith.mulf %166, %170 : vector<2x32xf32>
    %172 = vector.extract_strided_slice %3 {offsets = [0, 0], sizes = [1, 32], strides = [1, 1]} : vector<1x128xf32> to vector<1x32xf32>
    %173 = vector.broadcast %172 : vector<1x32xf32> to vector<2x32xf32>
    %174 = arith.mulf %171, %173 : vector<2x32xf32>
    %cst_35 = arith.constant dense<0.000000e+00> : vector<2xf32>
    %175 = vector.multi_reduction <add>, %174, %cst_35 [1] : vector<2x32xf32> to vector<2xf32>
    %176 = vector.shape_cast %175 : vector<2xf32> to vector<2x1xf32>
    %177 = vector.extract_strided_slice %4 {offsets = [0, 0], sizes = [1, 1], strides = [1, 1]} : vector<1x128xf32> to vector<1x1xf32>
    %178 = vector.broadcast %177 : vector<1x1xf32> to vector<2x1xf32>
    %179 = arith.addf %176, %178 : vector<2x1xf32>
    %c0_36 = arith.constant 0 : index
    %c0_37 = arith.constant 0 : index
    %180 = vector.load %arg2[%c0_36, %c0_37] : memref<2x1xf32, #tpu.memory_space<vmem>>, vector<2x1xf32>
    tpu.vector_store %arg2[%c0_36, %c0_37], %179 {strides = array<i32>} : memref<2x1xf32, #tpu.memory_space<vmem>>, vector<2x1xf32>,
    return
  }
}

</mosaic_0001>

<llo_original>
// kernel: tpu_custom_call.1
$region0: #{tpu_custom_call.1}
  #allocation0 [shape = 'u32[]', space=smem, size = 0x4, offset = 0x4, fixed_abs, tag = 'smem constant byte address 0x4 - core index']
  #allocation1 [shape = 'u32[144,128]{1,0:T(1,128)}', space=vmem, size = 0x12000, scoped, tag = 'internal scratch']
  %s0 = inlined_call_operand.hbm [shape: f32[16,24], index: 0, kind: input, shape index: {}]
  %s1 = inlined_call_operand.hbm [shape: f32[59,128], index: 1, kind: input, shape index: {}]
  %s2 = inlined_call_operand.vmem [shape: f32[2,1], index: 2, kind: output, shape index: {}]
  %s3 = sld [smem:[#allocation0]]
  $region26: #{tpu_custom_call.1} parent=0
    _
  %s5 = ssub.s32 1, %s3
  %s6 = scalar_select 0, %s5, %s3
  $region1: #{tpu_custom_call.1} parent=0
    #allocation2 [shape = 'u8[8192]{0}', space=vmem, size = 0x2000, scoped, tag = 'input window, operand 0, single buffered']
    #allocation3 [shape = 's32[1]{0}', space=sflag, size = 0x4, scoped, tag = 'scoped memory for tpu_custom_call.1']
    #allocation4 [shape = 'u8[32768]{0}', space=vmem, size = 0x8000, scoped, tag = 'input window, operand 1, single buffered']
    #allocation5 [shape = 's32[1]{0}', space=sflag, size = 0x4, scoped, tag = 'scoped memory for tpu_custom_call.1']
    %7 = vsyncpa [#allocation3], 0
    %8 = vsyncpa [#allocation5], 0
    // Predicated region
    $region2: #{tpu_custom_call.1} parent=1 // pred_check
      _
    $region3: #{tpu_custom_call.1} parent=1 // pred_check_branch
      %10 = sbr.rel (0) target = $region5
    $region4: #{tpu_custom_call.1} parent=1 // pred_region
      %s12 = ssub.s32 256, 256
      %13 = vsyncadd [#allocation3], %s12
      %s14 = sshll.u32 [#allocation2], 4
      %s15 = int_to_ptr.vmem [resolvable:$true] %s14
      %20 = dma.hbm_to_vmem [thread:$0]  %s0, 256, %s15, [#allocation3], 128, 128, 8
    $region5: #{tpu_custom_call.1} parent=1 // pred_fallthru
      _
    // Predicated region
    $region6: #{tpu_custom_call.1} parent=1 // pred_check
      _
    $region7: #{tpu_custom_call.1} parent=1 // pred_check_branch
      %22 = sbr.rel (0) target = $region9
    $region8: #{tpu_custom_call.1} parent=1 // pred_region
      %s24 = ssub.s32 1024, 1024
      %25 = vsyncadd [#allocation5], %s24
      %s26 = sshll.u32 [#allocation4], 4
      %s27 = int_to_ptr.vmem [resolvable:$true] %s26
      %32 = dma.hbm_to_vmem [thread:$0]  %s1, 1024, %s27, [#allocation5], 128, 128, 8
    $region9: #{tpu_custom_call.1} parent=1 // pred_fallthru
      _
    // Predicated region
    $region10: #{tpu_custom_call.1} parent=1 // pred_check
      _
    $region11: #{tpu_custom_call.1} parent=1 // pred_check_branch
      %34 = sbr.rel (0) target = $region13
    $region12: #{tpu_custom_call.1} parent=1 // pred_region
      %35 = dma.done [#allocation3], 256
    $region13: #{tpu_custom_call.1} parent=1 // pred_fallthru
      _
    // Predicated region
    $region14: #{tpu_custom_call.1} parent=1 // pred_check
      _
    $region15: #{tpu_custom_call.1} parent=1 // pred_check_branch
      %37 = sbr.rel (0) target = $region17
    $region16: #{tpu_custom_call.1} parent=1 // pred_region
      %38 = dma.done [#allocation5], 1024
    $region17: #{tpu_custom_call.1} parent=1 // pred_fallthru
      _
    %v39 = vld [vmem:[#allocation4] sm:$0xff]
    %v40 = vld [vmem:[#allocation4 + $0x8] sm:$0xff]
    %v41 = vld [vmem:[#allocation4 + $0x10] sm:$0xff]
    %v42 = vld [vmem:[#allocation4 + $0x18] sm:$0xff]
    %v43 = vld [vmem:[#allocation4 + $0x20] sm:$0xff]
    %v44 = vld [vmem:[#allocation4 + $0x28] sm:$0xff]
    %v45 = vld [vmem:[#allocation4 + $0x30] sm:$0xff]
    %v46 = vld [vmem:[#allocation4 + $0x38] sm:$0x1]
    %v47 = vld [vmem:[#allocation4 + $0x39] sm:$0x1]
    %v48 = vld [vmem:[#allocation4 + $0x3a] sm:$0x1]
    %v49 = vld [vmem:[#allocation2] sm:$0xff]
    %v50 = vld [vmem:[#allocation2 + $0x8] sm:$0xff]
    %v51 = vlaneseq
    %v52 = vshrl.u32 %v51, 7
    %v53 = vsub.s32 0, %v52
    %v54 = vrot.slane %v46, %v53
    %vm55 = vcmask 195584
    %v57 = vsel %vm55, %v49, 0
    %v60 = vsel %vm55, %v50, 0
    %62 = vmatprep.subr.mxu0 0.0
    %63 = vmatpush1.msra.mxu0 %v39
    %64 = vmatprep.subr.mxu0 0.0
    %65 = vmatpush1.msra.mxu0 %v40
    %66 = vmatprep.subr.mxu0 0.0
    %67 = vmatpush1.msra.mxu0 %v41
    %68 = vmatprep.subr.mxu0 0.0
    %69 = vmatpush1.msra.mxu0 0.0
    %70 = vmatprep.subr.mxu0 0.0
    %71 = vmatpush1.msra.mxu0 0.0
    %72 = vmatprep.subr.mxu0 0.0
    %73 = vmatpush1.msra.mxu0 0.0
    %74 = vmatprep.subr.mxu0 0.0
    %75 = vmatpush1.msra.mxu0 0.0
    %76 = vmatprep.subr.mxu0 0.0
    %77 = vmatpush1.msra.mxu0 0.0
    %78 = vmatprep.subr.mxu0 0.0
    %79 = vmatpush1.msra.mxu0 0.0
    %80 = vmatprep.subr.mxu0 0.0
    %81 = vmatpush1.msra.mxu0 0.0
    %82 = vmatprep.subr.mxu0 0.0
    %83 = vmatpush1.msra.mxu0 0.0
    %84 = vmatprep.subr.mxu0 0.0
    %85 = vmatpush1.msra.mxu0 0.0
    %86 = vmatprep.subr.mxu0 0.0
    %87 = vmatpush1.msra.mxu0 0.0
    %88 = vmatprep.subr.mxu0 0.0
    %89 = vmatpush1.msra.mxu0 0.0
    %90 = vmatprep.subr.mxu0 0.0
    %91 = vmatpush1.msra.mxu0 0.0
    %92 = vmatprep.subr.mxu0 0.0
    %93 = vmatpush1.msra.mxu0 0.0
    %94 = vmatprep.subr.mxu0 0.0
    %95 = vmatpush1.msra.mxu0 0.0
    %96 = vmatprep.subr.mxu0 0.0
    %97 = vmatpush1.msra.mxu0 0.0
    %98 = vmatprep.subr.mxu0 0.0
    %99 = vmatpush1.msra.mxu0 0.0
    %100 = vmatprep.subr.mxu0 0.0
    %101 = vmatpush1.msra.mxu0 0.0
    %102 = vmatprep.subr.mxu0 0.0
    %103 = vmatpush1.msra.mxu0 0.0
    %104 = vmatprep.subr.mxu0 0.0
    %105 = vmatpush1.msra.mxu0 0.0
    %106 = vmatprep.subr.mxu0 0.0
    %107 = vmatpush1.msra.mxu0 0.0
    %108 = vmatprep.subr.mxu0 0.0
    %109 = vmatpush1.msra.mxu0 0.0
    %110 = vmatprep.subr.mxu0 0.0
    %111 = vmatpush1.msra.mxu0 0.0
    %112 = vmatprep.subr.mxu0 0.0
    %113 = vmatpush1.msra.mxu0 0.0
    %114 = vmatprep.subr.mxu0 0.0
    %115 = vmatpush1.msra.mxu0 0.0
    %116 = vmatprep.subr.mxu0 0.0
    %117 = vmatpush1.msra.mxu0 0.0
    %118 = vmatprep.subr.mxu0 0.0
    %119 = vmatpush1.msra.mxu0 0.0
    %120 = vmatprep.subr.mxu0 0.0
    %121 = vmatpush1.msra.mxu0 0.0
    %122 = vmatprep.subr.mxu0 0.0
    %123 = vmatpush1.msra.mxu0 0.0
    %124 = vmatprep.subr.mxu0 0.0
    %125 = vmatpush1.msra.mxu0 0.0
    %126 = vmatprep.mubr.f32.mxu0 0.0
    %127 = vmatmul.mubr.f32.gmra.mrb[0].mxu0 %v57
    %v128 = vpop.f32.mrb[0].mxu0
    %v129 = vadd.f32 %v54, %v128
    %v130 = vpop.f32.mrb[0].mxu0
    %131 = vmatprep.mubr.f32.mxu0 0.0
    %132 = vmatmul.mubr.f32.gmra.mrb[0].mxu0 %v60
    %v133 = vpop.f32.mrb[0].mxu0
    %v134 = vadd.f32 %v54, %v133
    %v135 = vpop.f32.mrb[0].mxu0
    %136 = vdwg.mxu0
    %v137 = vlaneseq
    %v138 = vand.u32 %v137, 127
    %vm139 = vcmp.ge.s32.totalorder %v138, 64
    %vm140 = vcmp.lt.s32.totalorder %v138, 96
    %vm141 = vmand %vm139, %vm140
    %v142 = vsel %vm141, 1.0, 0.5
    %vm143 = vcmask 261120
    %v145 = vsel %vm143, 0.0, 0
    %147 = vmatprep.subr.mxu0 0.0
    %148 = vmatpush1.msra.mxu0 %v42
    %149 = vmatprep.subr.mxu0 0.0
    %150 = vmatpush1.msra.mxu0 %v43
    %151 = vmatprep.subr.mxu0 0.0
    %152 = vmatpush1.msra.mxu0 %v44
    %153 = vmatprep.subr.mxu0 0.0
    %154 = vmatpush1.msra.mxu0 %v45
    %155 = vmatprep.subr.mxu0 0.0
    %156 = vmatpush1.msra.mxu0 0.0
    %157 = vmatprep.subr.mxu0 0.0
    %158 = vmatpush1.msra.mxu0 0.0
    %159 = vmatprep.subr.mxu0 0.0
    %160 = vmatpush1.msra.mxu0 0.0
    %161 = vmatprep.subr.mxu0 0.0
    %162 = vmatpush1.msra.mxu0 0.0
    %163 = vmatprep.subr.mxu0 0.0
    %164 = vmatpush1.msra.mxu0 0.0
    %165 = vmatprep.subr.mxu0 0.0
    %166 = vmatpush1.msra.mxu0 0.0
    %167 = vmatprep.subr.mxu0 0.0
    %168 = vmatpush1.msra.mxu0 0.0
    %169 = vmatprep.subr.mxu0 0.0
    %170 = vmatpush1.msra.mxu0 0.0
    %171 = vmatprep.subr.mxu0 0.0
    %172 = vmatpush1.msra.mxu0 0.0
    %173 = vmatprep.subr.mxu0 0.0
    %174 = vmatpush1.msra.mxu0 0.0
    %175 = vmatprep.subr.mxu0 0.0
    %176 = vmatpush1.msra.mxu0 0.0
    %177 = vmatprep.subr.mxu0 0.0
    %178 = vmatpush1.msra.mxu0 0.0
    %179 = vmatprep.subr.mxu0 0.0
    %180 = vmatpush1.msra.mxu0 0.0
    %181 = vmatprep.subr.mxu0 0.0
    %182 = vmatpush1.msra.mxu0 0.0
    %183 = vmatprep.subr.mxu0 0.0
    %184 = vmatpush1.msra.mxu0 0.0
    %185 = vmatprep.subr.mxu0 0.0
    %186 = vmatpush1.msra.mxu0 0.0
    %187 = vmatprep.subr.mxu0 0.0
    %188 = vmatpush1.msra.mxu0 0.0
    %189 = vmatprep.subr.mxu0 0.0
    %190 = vmatpush1.msra.mxu0 0.0
    %191 = vmatprep.subr.mxu0 0.0
    %192 = vmatpush1.msra.mxu0 0.0
    %193 = vmatprep.subr.mxu0 0.0
    %194 = vmatpush1.msra.mxu0 0.0
    %195 = vmatprep.subr.mxu0 0.0
    %196 = vmatpush1.msra.mxu0 0.0
    %197 = vmatprep.subr.mxu0 0.0
    %198 = vmatpush1.msra.mxu0 0.0
    %199 = vmatprep.subr.mxu0 0.0
    %200 = vmatpush1.msra.mxu0 0.0
    %201 = vmatprep.subr.mxu0 0.0
    %202 = vmatpush1.msra.mxu0 0.0
    %203 = vmatprep.subr.mxu0 0.0
    %204 = vmatpush1.msra.mxu0 0.0
    %205 = vmatprep.subr.mxu0 0.0
    %206 = vmatpush1.msra.mxu0 0.0
    %207 = vmatprep.subr.mxu0 0.0
    %208 = vmatpush1.msra.mxu0 0.0
    %209 = vmatprep.subr.mxu0 0.0
    %210 = vmatpush1.msra.mxu0 0.0
    %211 = vmatprep.mubr.f32.mxu0 0.0
    %212 = vmatmul.mubr.f32.gmra.mrb[0].mxu0 %v145
    %v213 = vpop.f32.mrb[0].mxu0
    %v214 = vadd.f32 0.0, %v213
    %v215 = vpop.f32.mrb[0].mxu0
    %216 = vdwg.mxu0
    %v217 = vadd.f32 %v129, %v214
    %v218 = vmul.f32 %v217, %v142
    %v219 = vtanh.pop %v218
    %v220 = vmul.f32 %v219, 0.5
    %v221 = vadd.f32 %v220, 0.5
    %v222 = vsel %vm141, %v219, %v221
    %v223 = vmul.f32 %v222, 0.0
    %225 = vrot.lane.b32.xlu0 %v222, 64
    %v226 = vpop.permute.xlu0 %225
    %v228 = vmul.f32 %v222, %v226
    %230 = vrot.lane.b32.xlu0 %v228, 32
    %v231 = vpop.permute.xlu0 %230
    %v233 = vadd.f32 %v223, %v231
    %v234 = vtanh.pop %v233
    %236 = vrot.lane.b32.xlu0 %v234, 64
    %v237 = vpop.permute.xlu0 %236
    %v239 = vmul.f32 %v222, %v237
    %241 = vrot.lane.b32.xlu0 %v239, 32
    %v242 = vpop.permute.xlu0 %241
    %v243 = vsel %vm143, %v242, 0
    %245 = vmatprep.subr.mxu0 0.0
    %246 = vmatpush1.msra.mxu0 %v42
    %247 = vmatprep.subr.mxu0 0.0
    %248 = vmatpush1.msra.mxu0 %v43
    %249 = vmatprep.subr.mxu0 0.0
    %250 = vmatpush1.msra.mxu0 %v44
    %251 = vmatprep.subr.mxu0 0.0
    %252 = vmatpush1.msra.mxu0 %v45
    %253 = vmatprep.subr.mxu0 0.0
    %254 = vmatpush1.msra.mxu0 0.0
    %255 = vmatprep.subr.mxu0 0.0
    %256 = vmatpush1.msra.mxu0 0.0
    %257 = vmatprep.subr.mxu0 0.0
    %258 = vmatpush1.msra.mxu0 0.0
    %259 = vmatprep.subr.mxu0 0.0
    %260 = vmatpush1.msra.mxu0 0.0
    %261 = vmatprep.subr.mxu0 0.0
    %262 = vmatpush1.msra.mxu0 0.0
    %263 = vmatprep.subr.mxu0 0.0
    %264 = vmatpush1.msra.mxu0 0.0
    %265 = vmatprep.subr.mxu0 0.0
    %266 = vmatpush1.msra.mxu0 0.0
    %267 = vmatprep.subr.mxu0 0.0
    %268 = vmatpush1.msra.mxu0 0.0
    %269 = vmatprep.subr.mxu0 0.0
    %270 = vmatpush1.msra.mxu0 0.0
    %271 = vmatprep.subr.mxu0 0.0
    %272 = vmatpush1.msra.mxu0 0.0
    %273 = vmatprep.subr.mxu0 0.0
    %274 = vmatpush1.msra.mxu0 0.0
    %275 = vmatprep.subr.mxu0 0.0
    %276 = vmatpush1.msra.mxu0 0.0
    %277 = vmatprep.subr.mxu0 0.0
    %278 = vmatpush1.msra.mxu0 0.0
    %279 = vmatprep.subr.mxu0 0.0
    %280 = vmatpush1.msra.mxu0 0.0
    %281 = vmatprep.subr.mxu0 0.0
    %282 = vmatpush1.msra.mxu0 0.0
    %283 = vmatprep.subr.mxu0 0.0
    %284 = vmatpush1.msra.mxu0 0.0
    %285 = vmatprep.subr.mxu0 0.0
    %286 = vmatpush1.msra.mxu0 0.0
    %287 = vmatprep.subr.mxu0 0.0
    %288 = vmatpush1.msra.mxu0 0.0
    %289 = vmatprep.subr.mxu0 0.0
    %290 = vmatpush1.msra.mxu0 0.0
    %291 = vmatprep.subr.mxu0 0.0
    %292 = vmatpush1.msra.mxu0 0.0
    %293 = vmatprep.subr.mxu0 0.0
    %294 = vmatpush1.msra.mxu0 0.0
    %295 = vmatprep.subr.mxu0 0.0
    %296 = vmatpush1.msra.mxu0 0.0
    %297 = vmatprep.subr.mxu0 0.0
    %298 = vmatpush1.msra.mxu0 0.0
    %299 = vmatprep.subr.mxu0 0.0
    %300 = vmatpush1.msra.mxu0 0.0
    %301 = vmatprep.subr.mxu0 0.0
    %302 = vmatpush1.msra.mxu0 0.0
    %303 = vmatprep.subr.mxu0 0.0
    %304 = vmatpush1.msra.mxu0 0.0
    %305 = vmatprep.subr.mxu0 0.0
    %306 = vmatpush1.msra.mxu0 0.0
    %307 = vmatprep.subr.mxu0 0.0
    %308 = vmatpush1.msra.mxu0 0.0
    %309 = vmatprep.mubr.f32.mxu0 0.0
    %310 = vmatmul.mubr.f32.gmra.mrb[0].mxu0 %v243
    %v311 = vpop.f32.mrb[0].mxu0
    %v312 = vadd.f32 0.0, %v311
    %v313 = vpop.f32.mrb[0].mxu0
    %314 = vdwg.mxu0
    %v316 = vrot.slane %v312, 6
    %v318 = vadd.f32 %v129, %v316
    %v319 = vmul.f32 %v318, %v142
    %v320 = vtanh.pop %v319
    %v321 = vmul.f32 %v320, 0.5
    %v322 = vadd.f32 %v321, 0.5
    %v323 = vsel %vm141, %v320, %v322
    %v325 = vrot.slane %v233, 6
    %v327 = vmul.f32 %v323, %v325
    %329 = vrot.lane.b32.xlu0 %v323, 64
    %v330 = vpop.permute.xlu0 %329
    %v332 = vmul.f32 %v323, %v330
    %334 = vrot.lane.b32.xlu0 %v332, 32
    %v335 = vpop.permute.xlu0 %334
    %v337 = vadd.f32 %v327, %v335
    %v338 = vtanh.pop %v337
    %340 = vrot.lane.b32.xlu0 %v338, 64
    %v341 = vpop.permute.xlu0 %340
    %v343 = vmul.f32 %v323, %v341
    %v345 = vrot.slane %v343, 2
    %346 = vrot.lane.b32.xlu0 %v345, 32
    %v347 = vpop.permute.xlu0 %346
    %v348 = vsel %vm143, %v347, 0
    %350 = vmatprep.subr.mxu0 0.0
    %351 = vmatpush1.msra.mxu0 %v42
    %352 = vmatprep.subr.mxu0 0.0
    %353 = vmatpush1.msra.mxu0 %v43
    %354 = vmatprep.subr.mxu0 0.0
    %355 = vmatpush1.msra.mxu0 %v44
    %356 = vmatprep.subr.mxu0 0.0
    %357 = vmatpush1.msra.mxu0 %v45
    %358 = vmatprep.subr.mxu0 0.0
    %359 = vmatpush1.msra.mxu0 0.0
    %360 = vmatprep.subr.mxu0 0.0
    %361 = vmatpush1.msra.mxu0 0.0
    %362 = vmatprep.subr.mxu0 0.0
    %363 = vmatpush1.msra.mxu0 0.0
    %364 = vmatprep.subr.mxu0 0.0
    %365 = vmatpush1.msra.mxu0 0.0
    %366 = vmatprep.subr.mxu0 0.0
    %367 = vmatpush1.msra.mxu0 0.0
    %368 = vmatprep.subr.mxu0 0.0
    %369 = vmatpush1.msra.mxu0 0.0
    %370 = vmatprep.subr.mxu0 0.0
    %371 = vmatpush1.msra.mxu0 0.0
    %372 = vmatprep.subr.mxu0 0.0
    %373 = vmatpush1.msra.mxu0 0.0
    %374 = vmatprep.subr.mxu0 0.0
    %375 = vmatpush1.msra.mxu0 0.0
    %376 = vmatprep.subr.mxu0 0.0
    %377 = vmatpush1.msra.mxu0 0.0
    %378 = vmatprep.subr.mxu0 0.0
    %379 = vmatpush1.msra.mxu0 0.0
    %380 = vmatprep.subr.mxu0 0.0
    %381 = vmatpush1.msra.mxu0 0.0
    %382 = vmatprep.subr.mxu0 0.0
    %383 = vmatpush1.msra.mxu0 0.0
    %384 = vmatprep.subr.mxu0 0.0
    %385 = vmatpush1.msra.mxu0 0.0
    %386 = vmatprep.subr.mxu0 0.0
    %387 = vmatpush1.msra.mxu0 0.0
    %388 = vmatprep.subr.mxu0 0.0
    %389 = vmatpush1.msra.mxu0 0.0
    %390 = vmatprep.subr.mxu0 0.0
    %391 = vmatpush1.msra.mxu0 0.0
    %392 = vmatprep.subr.mxu0 0.0
    %393 = vmatpush1.msra.mxu0 0.0
    %394 = vmatprep.subr.mxu0 0.0
    %395 = vmatpush1.msra.mxu0 0.0
    %396 = vmatprep.subr.mxu0 0.0
    %397 = vmatpush1.msra.mxu0 0.0
    %398 = vmatprep.subr.mxu0 0.0
    %399 = vmatpush1.msra.mxu0 0.0
    %400 = vmatprep.subr.mxu0 0.0
    %401 = vmatpush1.msra.mxu0 0.0
    %402 = vmatprep.subr.mxu0 0.0
    %403 = vmatpush1.msra.mxu0 0.0
    %404 = vmatprep.subr.mxu0 0.0
    %405 = vmatpush1.msra.mxu0 0.0
    %406 = vmatprep.subr.mxu0 0.0
    %407 = vmatpush1.msra.mxu0 0.0
    %408 = vmatprep.subr.mxu0 0.0
    %409 = vmatpush1.msra.mxu0 0.0
    %410 = vmatprep.subr.mxu0 0.0
    %411 = vmatpush1.msra.mxu0 0.0
    %412 = vmatprep.subr.mxu0 0.0
    %413 = vmatpush1.msra.mxu0 0.0
    %414 = vmatprep.mubr.f32.mxu0 0.0
    %415 = vmatmul.mubr.f32.gmra.mrb[0].mxu0 %v348
    %v416 = vpop.f32.mrb[0].mxu0
    %v417 = vadd.f32 0.0, %v416
    %v418 = vpop.f32.mrb[0].mxu0
    %419 = vdwg.mxu0
    %v421 = vrot.slane %v417, 4
    %v423 = vadd.f32 %v129, %v421
    %v424 = vmul.f32 %v423, %v142
    %v425 = vtanh.pop %v424
    %v426 = vmul.f32 %v425, 0.5
    %v427 = vadd.f32 %v426, 0.5
    %v428 = vsel %vm141, %v425, %v427
    %v430 = vrot.slane %v337, 6
    %v432 = vmul.f32 %v428, %v430
    %434 = vrot.lane.b32.xlu0 %v428, 64
    %v435 = vpop.permute.xlu0 %434
    %v437 = vmul.f32 %v428, %v435
    %439 = vrot.lane.b32.xlu0 %v437, 32
    %v440 = vpop.permute.xlu0 %439
    %v442 = vadd.f32 %v432, %v440
    %v443 = vtanh.pop %v442
    %445 = vrot.lane.b32.xlu0 %v443, 64
    %v446 = vpop.permute.xlu0 %445
    %v448 = vmul.f32 %v428, %v446
    %v450 = vrot.slane %v448, 4
    %451 = vrot.lane.b32.xlu0 %v450, 32
    %v452 = vpop.permute.xlu0 %451
    %v453 = vsel %vm143, %v452, 0
    %455 = vmatprep.subr.mxu0 0.0
    %456 = vmatpush1.msra.mxu0 %v42
    %457 = vmatprep.subr.mxu0 0.0
    %458 = vmatpush1.msra.mxu0 %v43
    %459 = vmatprep.subr.mxu0 0.0
    %460 = vmatpush1.msra.mxu0 %v44
    %461 = vmatprep.subr.mxu0 0.0
    %462 = vmatpush1.msra.mxu0 %v45
    %463 = vmatprep.subr.mxu0 0.0
    %464 = vmatpush1.msra.mxu0 0.0
    %465 = vmatprep.subr.mxu0 0.0
    %466 = vmatpush1.msra.mxu0 0.0
    %467 = vmatprep.subr.mxu0 0.0
    %468 = vmatpush1.msra.mxu0 0.0
    %469 = vmatprep.subr.mxu0 0.0
    %470 = vmatpush1.msra.mxu0 0.0
    %471 = vmatprep.subr.mxu0 0.0
    %472 = vmatpush1.msra.mxu0 0.0
    %473 = vmatprep.subr.mxu0 0.0
    %474 = vmatpush1.msra.mxu0 0.0
    %475 = vmatprep.subr.mxu0 0.0
    %476 = vmatpush1.msra.mxu0 0.0
    %477 = vmatprep.subr.mxu0 0.0
    %478 = vmatpush1.msra.mxu0 0.0
    %479 = vmatprep.subr.mxu0 0.0
    %480 = vmatpush1.msra.mxu0 0.0
    %481 = vmatprep.subr.mxu0 0.0
    %482 = vmatpush1.msra.mxu0 0.0
    %483 = vmatprep.subr.mxu0 0.0
    %484 = vmatpush1.msra.mxu0 0.0
    %485 = vmatprep.subr.mxu0 0.0
    %486 = vmatpush1.msra.mxu0 0.0
    %487 = vmatprep.subr.mxu0 0.0
    %488 = vmatpush1.msra.mxu0 0.0
    %489 = vmatprep.subr.mxu0 0.0
    %490 = vmatpush1.msra.mxu0 0.0
    %491 = vmatprep.subr.mxu0 0.0
    %492 = vmatpush1.msra.mxu0 0.0
    %493 = vmatprep.subr.mxu0 0.0
    %494 = vmatpush1.msra.mxu0 0.0
    %495 = vmatprep.subr.mxu0 0.0
    %496 = vmatpush1.msra.mxu0 0.0
    %497 = vmatprep.subr.mxu0 0.0
    %498 = vmatpush1.msra.mxu0 0.0
    %499 = vmatprep.subr.mxu0 0.0
    %500 = vmatpush1.msra.mxu0 0.0
    %501 = vmatprep.subr.mxu0 0.0
    %502 = vmatpush1.msra.mxu0 0.0
    %503 = vmatprep.subr.mxu0 0.0
    %504 = vmatpush1.msra.mxu0 0.0
    %505 = vmatprep.subr.mxu0 0.0
    %506 = vmatpush1.msra.mxu0 0.0
    %507 = vmatprep.subr.mxu0 0.0
    %508 = vmatpush1.msra.mxu0 0.0
    %509 = vmatprep.subr.mxu0 0.0
    %510 = vmatpush1.msra.mxu0 0.0
    %511 = vmatprep.subr.mxu0 0.0
    %512 = vmatpush1.msra.mxu0 0.0
    %513 = vmatprep.subr.mxu0 0.0
    %514 = vmatpush1.msra.mxu0 0.0
    %515 = vmatprep.subr.mxu0 0.0
    %516 = vmatpush1.msra.mxu0 0.0
    %517 = vmatprep.subr.mxu0 0.0
    %518 = vmatpush1.msra.mxu0 0.0
    %519 = vmatprep.mubr.f32.mxu0 0.0
    %520 = vmatmul.mubr.f32.gmra.mrb[0].mxu0 %v453
    %v521 = vpop.f32.mrb[0].mxu0
    %v522 = vadd.f32 0.0, %v521
    %v523 = vpop.f32.mrb[0].mxu0
    %524 = vdwg.mxu0
    %v526 = vrot.slane %v522, 2
    %v528 = vadd.f32 %v129, %v526
    %v529 = vmul.f32 %v528, %v142
    %v530 = vtanh.pop %v529
    %v531 = vmul.f32 %v530, 0.5
    %v532 = vadd.f32 %v531, 0.5
    %v533 = vsel %vm141, %v530, %v532
    %v535 = vrot.slane %v442, 6
    %v537 = vmul.f32 %v533, %v535
    %539 = vrot.lane.b32.xlu0 %v533, 64
    %v540 = vpop.permute.xlu0 %539
    %v542 = vmul.f32 %v533, %v540
    %544 = vrot.lane.b32.xlu0 %v542, 32
    %v545 = vpop.permute.xlu0 %544
    %v547 = vadd.f32 %v537, %v545
    %v548 = vtanh.pop %v547
    %550 = vrot.lane.b32.xlu0 %v548, 64
    %v551 = vpop.permute.xlu0 %550
    %v553 = vmul.f32 %v533, %v551
    %v555 = vrot.slane %v553, 6
    %556 = vrot.lane.b32.xlu0 %v555, 32
    %v557 = vpop.permute.xlu0 %556
    %v558 = vsel %vm143, %v557, 0
    %560 = vmatprep.subr.mxu0 0.0
    %561 = vmatpush1.msra.mxu0 %v42
    %562 = vmatprep.subr.mxu0 0.0
    %563 = vmatpush1.msra.mxu0 %v43
    %564 = vmatprep.subr.mxu0 0.0
    %565 = vmatpush1.msra.mxu0 %v44
    %566 = vmatprep.subr.mxu0 0.0
    %567 = vmatpush1.msra.mxu0 %v45
    %568 = vmatprep.subr.mxu0 0.0
    %569 = vmatpush1.msra.mxu0 0.0
    %570 = vmatprep.subr.mxu0 0.0
    %571 = vmatpush1.msra.mxu0 0.0
    %572 = vmatprep.subr.mxu0 0.0
    %573 = vmatpush1.msra.mxu0 0.0
    %574 = vmatprep.subr.mxu0 0.0
    %575 = vmatpush1.msra.mxu0 0.0
    %576 = vmatprep.subr.mxu0 0.0
    %577 = vmatpush1.msra.mxu0 0.0
    %578 = vmatprep.subr.mxu0 0.0
    %579 = vmatpush1.msra.mxu0 0.0
    %580 = vmatprep.subr.mxu0 0.0
    %581 = vmatpush1.msra.mxu0 0.0
    %582 = vmatprep.subr.mxu0 0.0
    %583 = vmatpush1.msra.mxu0 0.0
    %584 = vmatprep.subr.mxu0 0.0
    %585 = vmatpush1.msra.mxu0 0.0
    %586 = vmatprep.subr.mxu0 0.0
    %587 = vmatpush1.msra.mxu0 0.0
    %588 = vmatprep.subr.mxu0 0.0
    %589 = vmatpush1.msra.mxu0 0.0
    %590 = vmatprep.subr.mxu0 0.0
    %591 = vmatpush1.msra.mxu0 0.0
    %592 = vmatprep.subr.mxu0 0.0
    %593 = vmatpush1.msra.mxu0 0.0
    %594 = vmatprep.subr.mxu0 0.0
    %595 = vmatpush1.msra.mxu0 0.0
    %596 = vmatprep.subr.mxu0 0.0
    %597 = vmatpush1.msra.mxu0 0.0
    %598 = vmatprep.subr.mxu0 0.0
    %599 = vmatpush1.msra.mxu0 0.0
    %600 = vmatprep.subr.mxu0 0.0
    %601 = vmatpush1.msra.mxu0 0.0
    %602 = vmatprep.subr.mxu0 0.0
    %603 = vmatpush1.msra.mxu0 0.0
    %604 = vmatprep.subr.mxu0 0.0
    %605 = vmatpush1.msra.mxu0 0.0
    %606 = vmatprep.subr.mxu0 0.0
    %607 = vmatpush1.msra.mxu0 0.0
    %608 = vmatprep.subr.mxu0 0.0
    %609 = vmatpush1.msra.mxu0 0.0
    %610 = vmatprep.subr.mxu0 0.0
    %611 = vmatpush1.msra.mxu0 0.0
    %612 = vmatprep.subr.mxu0 0.0
    %613 = vmatpush1.msra.mxu0 0.0
    %614 = vmatprep.subr.mxu0 0.0
    %615 = vmatpush1.msra.mxu0 0.0
    %616 = vmatprep.subr.mxu0 0.0
    %617 = vmatpush1.msra.mxu0 0.0
    %618 = vmatprep.subr.mxu0 0.0
    %619 = vmatpush1.msra.mxu0 0.0
    %620 = vmatprep.subr.mxu0 0.0
    %621 = vmatpush1.msra.mxu0 0.0
    %622 = vmatprep.subr.mxu0 0.0
    %623 = vmatpush1.msra.mxu0 0.0
    %624 = vmatprep.mubr.f32.mxu0 0.0
    %625 = vmatmul.mubr.f32.gmra.mrb[0].mxu0 %v558
    %v626 = vpop.f32.mrb[0].mxu0
    %v627 = vadd.f32 0.0, %v626
    %v628 = vpop.f32.mrb[0].mxu0
    %629 = vdwg.mxu0
    %v630 = vadd.f32 %v134, %v627
    %v631 = vmul.f32 %v630, %v142
    %v632 = vtanh.pop %v631
    %v633 = vmul.f32 %v632, 0.5
    %v634 = vadd.f32 %v633, 0.5
    %v635 = vsel %vm141, %v632, %v634
    %v637 = vrot.slane %v547, 6
    %v639 = vmul.f32 %v635, %v637
    %641 = vrot.lane.b32.xlu0 %v635, 64
    %v642 = vpop.permute.xlu0 %641
    %v644 = vmul.f32 %v635, %v642
    %646 = vrot.lane.b32.xlu0 %v644, 32
    %v647 = vpop.permute.xlu0 %646
    %v649 = vadd.f32 %v639, %v647
    %v650 = vtanh.pop %v649
    %652 = vrot.lane.b32.xlu0 %v650, 64
    %v653 = vpop.permute.xlu0 %652
    %v655 = vmul.f32 %v635, %v653
    %657 = vrot.lane.b32.xlu0 %v655, 32
    %v658 = vpop.permute.xlu0 %657
    %v659 = vsel %vm143, %v658, 0
    %661 = vmatprep.subr.mxu0 0.0
    %662 = vmatpush1.msra.mxu0 %v42
    %663 = vmatprep.subr.mxu0 0.0
    %664 = vmatpush1.msra.mxu0 %v43
    %665 = vmatprep.subr.mxu0 0.0
    %666 = vmatpush1.msra.mxu0 %v44
    %667 = vmatprep.subr.mxu0 0.0
    %668 = vmatpush1.msra.mxu0 %v45
    %669 = vmatprep.subr.mxu0 0.0
    %670 = vmatpush1.msra.mxu0 0.0
    %671 = vmatprep.subr.mxu0 0.0
    %672 = vmatpush1.msra.mxu0 0.0
    %673 = vmatprep.subr.mxu0 0.0
    %674 = vmatpush1.msra.mxu0 0.0
    %675 = vmatprep.subr.mxu0 0.0
    %676 = vmatpush1.msra.mxu0 0.0
    %677 = vmatprep.subr.mxu0 0.0
    %678 = vmatpush1.msra.mxu0 0.0
    %679 = vmatprep.subr.mxu0 0.0
    %680 = vmatpush1.msra.mxu0 0.0
    %681 = vmatprep.subr.mxu0 0.0
    %682 = vmatpush1.msra.mxu0 0.0
    %683 = vmatprep.subr.mxu0 0.0
    %684 = vmatpush1.msra.mxu0 0.0
    %685 = vmatprep.subr.mxu0 0.0
    %686 = vmatpush1.msra.mxu0 0.0
    %687 = vmatprep.subr.mxu0 0.0
    %688 = vmatpush1.msra.mxu0 0.0
    %689 = vmatprep.subr.mxu0 0.0
    %690 = vmatpush1.msra.mxu0 0.0
    %691 = vmatprep.subr.mxu0 0.0
    %692 = vmatpush1.msra.mxu0 0.0
    %693 = vmatprep.subr.mxu0 0.0
    %694 = vmatpush1.msra.mxu0 0.0
    %695 = vmatprep.subr.mxu0 0.0
    %696 = vmatpush1.msra.mxu0 0.0
    %697 = vmatprep.subr.mxu0 0.0
    %698 = vmatpush1.msra.mxu0 0.0
    %699 = vmatprep.subr.mxu0 0.0
    %700 = vmatpush1.msra.mxu0 0.0
    %701 = vmatprep.subr.mxu0 0.0
    %702 = vmatpush1.msra.mxu0 0.0
    %703 = vmatprep.subr.mxu0 0.0
    %704 = vmatpush1.msra.mxu0 0.0
    %705 = vmatprep.subr.mxu0 0.0
    %706 = vmatpush1.msra.mxu0 0.0
    %707 = vmatprep.subr.mxu0 0.0
    %708 = vmatpush1.msra.mxu0 0.0
    %709 = vmatprep.subr.mxu0 0.0
    %710 = vmatpush1.msra.mxu0 0.0
    %711 = vmatprep.subr.mxu0 0.0
    %712 = vmatpush1.msra.mxu0 0.0
    %713 = vmatprep.subr.mxu0 0.0
    %714 = vmatpush1.msra.mxu0 0.0
    %715 = vmatprep.subr.mxu0 0.0
    %716 = vmatpush1.msra.mxu0 0.0
    %717 = vmatprep.subr.mxu0 0.0
    %718 = vmatpush1.msra.mxu0 0.0
    %719 = vmatprep.subr.mxu0 0.0
    %720 = vmatpush1.msra.mxu0 0.0
    %721 = vmatprep.subr.mxu0 0.0
    %722 = vmatpush1.msra.mxu0 0.0
    %723 = vmatprep.subr.mxu0 0.0
    %724 = vmatpush1.msra.mxu0 0.0
    %725 = vmatprep.mubr.f32.mxu0 0.0
    %726 = vmatmul.mubr.f32.gmra.mrb[0].mxu0 %v659
    %v727 = vpop.f32.mrb[0].mxu0
    %v728 = vadd.f32 0.0, %v727
    %v729 = vpop.f32.mrb[0].mxu0
    %730 = vdwg.mxu0
    %v732 = vrot.slane %v728, 6
    %v734 = vadd.f32 %v134, %v732
    %v735 = vmul.f32 %v734, %v142
    %v736 = vtanh.pop %v735
    %v737 = vmul.f32 %v736, 0.5
    %v738 = vadd.f32 %v737, 0.5
    %v739 = vsel %vm141, %v736, %v738
    %v741 = vrot.slane %v649, 6
    %v743 = vmul.f32 %v739, %v741
    %745 = vrot.lane.b32.xlu0 %v739, 64
    %v746 = vpop.permute.xlu0 %745
    %v748 = vmul.f32 %v739, %v746
    %750 = vrot.lane.b32.xlu0 %v748, 32
    %v751 = vpop.permute.xlu0 %750
    %v753 = vadd.f32 %v743, %v751
    %v754 = vtanh.pop %v753
    %756 = vrot.lane.b32.xlu0 %v754, 64
    %v757 = vpop.permute.xlu0 %756
    %v759 = vmul.f32 %v739, %v757
    %v761 = vrot.slane %v759, 2
    %762 = vrot.lane.b32.xlu0 %v761, 32
    %v763 = vpop.permute.xlu0 %762
    %v764 = vsel %vm143, %v763, 0
    %766 = vmatprep.subr.mxu0 0.0
    %767 = vmatpush1.msra.mxu0 %v42
    %768 = vmatprep.subr.mxu0 0.0
    %769 = vmatpush1.msra.mxu0 %v43
    %770 = vmatprep.subr.mxu0 0.0
    %771 = vmatpush1.msra.mxu0 %v44
    %772 = vmatprep.subr.mxu0 0.0
    %773 = vmatpush1.msra.mxu0 %v45
    %774 = vmatprep.subr.mxu0 0.0
    %775 = vmatpush1.msra.mxu0 0.0
    %776 = vmatprep.subr.mxu0 0.0
    %777 = vmatpush1.msra.mxu0 0.0
    %778 = vmatprep.subr.mxu0 0.0
    %779 = vmatpush1.msra.mxu0 0.0
    %780 = vmatprep.subr.mxu0 0.0
    %781 = vmatpush1.msra.mxu0 0.0
    %782 = vmatprep.subr.mxu0 0.0
    %783 = vmatpush1.msra.mxu0 0.0
    %784 = vmatprep.subr.mxu0 0.0
    %785 = vmatpush1.msra.mxu0 0.0
    %786 = vmatprep.subr.mxu0 0.0
    %787 = vmatpush1.msra.mxu0 0.0
    %788 = vmatprep.subr.mxu0 0.0
    %789 = vmatpush1.msra.mxu0 0.0
    %790 = vmatprep.subr.mxu0 0.0
    %791 = vmatpush1.msra.mxu0 0.0
    %792 = vmatprep.subr.mxu0 0.0
    %793 = vmatpush1.msra.mxu0 0.0
    %794 = vmatprep.subr.mxu0 0.0
    %795 = vmatpush1.msra.mxu0 0.0
    %796 = vmatprep.subr.mxu0 0.0
    %797 = vmatpush1.msra.mxu0 0.0
    %798 = vmatprep.subr.mxu0 0.0
    %799 = vmatpush1.msra.mxu0 0.0
    %800 = vmatprep.subr.mxu0 0.0
    %801 = vmatpush1.msra.mxu0 0.0
    %802 = vmatprep.subr.mxu0 0.0
    %803 = vmatpush1.msra.mxu0 0.0
    %804 = vmatprep.subr.mxu0 0.0
    %805 = vmatpush1.msra.mxu0 0.0
    %806 = vmatprep.subr.mxu0 0.0
    %807 = vmatpush1.msra.mxu0 0.0
    %808 = vmatprep.subr.mxu0 0.0
    %809 = vmatpush1.msra.mxu0 0.0
    %810 = vmatprep.subr.mxu0 0.0
    %811 = vmatpush1.msra.mxu0 0.0
    %812 = vmatprep.subr.mxu0 0.0
    %813 = vmatpush1.msra.mxu0 0.0
    %814 = vmatprep.subr.mxu0 0.0
    %815 = vmatpush1.msra.mxu0 0.0
    %816 = vmatprep.subr.mxu0 0.0
    %817 = vmatpush1.msra.mxu0 0.0
    %818 = vmatprep.subr.mxu0 0.0
    %819 = vmatpush1.msra.mxu0 0.0
    %820 = vmatprep.subr.mxu0 0.0
    %821 = vmatpush1.msra.mxu0 0.0
    %822 = vmatprep.subr.mxu0 0.0
    %823 = vmatpush1.msra.mxu0 0.0
    %824 = vmatprep.subr.mxu0 0.0
    %825 = vmatpush1.msra.mxu0 0.0
    %826 = vmatprep.subr.mxu0 0.0
    %827 = vmatpush1.msra.mxu0 0.0
    %828 = vmatprep.subr.mxu0 0.0
    %829 = vmatpush1.msra.mxu0 0.0
    %830 = vmatprep.mubr.f32.mxu0 0.0
    %831 = vmatmul.mubr.f32.gmra.mrb[0].mxu0 %v764
    %v832 = vpop.f32.mrb[0].mxu0
    %v833 = vadd.f32 0.0, %v832
    %v834 = vpop.f32.mrb[0].mxu0
    %835 = vdwg.mxu0
    %v837 = vrot.slane %v833, 4
    %v839 = vadd.f32 %v134, %v837
    %v840 = vmul.f32 %v839, %v142
    %v841 = vtanh.pop %v840
    %v842 = vmul.f32 %v841, 0.5
    %v843 = vadd.f32 %v842, 0.5
    %v844 = vsel %vm141, %v841, %v843
    %v846 = vrot.slane %v753, 6
    %v848 = vmul.f32 %v844, %v846
    %850 = vrot.lane.b32.xlu0 %v844, 64
    %v851 = vpop.permute.xlu0 %850
    %v853 = vmul.f32 %v844, %v851
    %855 = vrot.lane.b32.xlu0 %v853, 32
    %v856 = vpop.permute.xlu0 %855
    %v858 = vadd.f32 %v848, %v856
    %v859 = vtanh.pop %v858
    %861 = vrot.lane.b32.xlu0 %v859, 64
    %v862 = vpop.permute.xlu0 %861
    %v864 = vmul.f32 %v844, %v862
    %v866 = vrot.slane %v864, 4
    %867 = vrot.lane.b32.xlu0 %v866, 32
    %v868 = vpop.permute.xlu0 %867
    %v869 = vsel %vm143, %v868, 0
    %871 = vmatprep.subr.mxu0 0.0
    %872 = vmatpush1.msra.mxu0 %v42
    %873 = vmatprep.subr.mxu0 0.0
    %874 = vmatpush1.msra.mxu0 %v43
    %875 = vmatprep.subr.mxu0 0.0
    %876 = vmatpush1.msra.mxu0 %v44
    %877 = vmatprep.subr.mxu0 0.0
    %878 = vmatpush1.msra.mxu0 %v45
    %879 = vmatprep.subr.mxu0 0.0
    %880 = vmatpush1.msra.mxu0 0.0
    %881 = vmatprep.subr.mxu0 0.0
    %882 = vmatpush1.msra.mxu0 0.0
    %883 = vmatprep.subr.mxu0 0.0
    %884 = vmatpush1.msra.mxu0 0.0
    %885 = vmatprep.subr.mxu0 0.0
    %886 = vmatpush1.msra.mxu0 0.0
    %887 = vmatprep.subr.mxu0 0.0
    %888 = vmatpush1.msra.mxu0 0.0
    %889 = vmatprep.subr.mxu0 0.0
    %890 = vmatpush1.msra.mxu0 0.0
    %891 = vmatprep.subr.mxu0 0.0
    %892 = vmatpush1.msra.mxu0 0.0
    %893 = vmatprep.subr.mxu0 0.0
    %894 = vmatpush1.msra.mxu0 0.0
    %895 = vmatprep.subr.mxu0 0.0
    %896 = vmatpush1.msra.mxu0 0.0
    %897 = vmatprep.subr.mxu0 0.0
    %898 = vmatpush1.msra.mxu0 0.0
    %899 = vmatprep.subr.mxu0 0.0
    %900 = vmatpush1.msra.mxu0 0.0
    %901 = vmatprep.subr.mxu0 0.0
    %902 = vmatpush1.msra.mxu0 0.0
    %903 = vmatprep.subr.mxu0 0.0
    %904 = vmatpush1.msra.mxu0 0.0
    %905 = vmatprep.subr.mxu0 0.0
    %906 = vmatpush1.msra.mxu0 0.0
    %907 = vmatprep.subr.mxu0 0.0
    %908 = vmatpush1.msra.mxu0 0.0
    %909 = vmatprep.subr.mxu0 0.0
    %910 = vmatpush1.msra.mxu0 0.0
    %911 = vmatprep.subr.mxu0 0.0
    %912 = vmatpush1.msra.mxu0 0.0
    %913 = vmatprep.subr.mxu0 0.0
    %914 = vmatpush1.msra.mxu0 0.0
    %915 = vmatprep.subr.mxu0 0.0
    %916 = vmatpush1.msra.mxu0 0.0
    %917 = vmatprep.subr.mxu0 0.0
    %918 = vmatpush1.msra.mxu0 0.0
    %919 = vmatprep.subr.mxu0 0.0
    %920 = vmatpush1.msra.mxu0 0.0
    %921 = vmatprep.subr.mxu0 0.0
    %922 = vmatpush1.msra.mxu0 0.0
    %923 = vmatprep.subr.mxu0 0.0
    %924 = vmatpush1.msra.mxu0 0.0
    %925 = vmatprep.subr.mxu0 0.0
    %926 = vmatpush1.msra.mxu0 0.0
    %927 = vmatprep.subr.mxu0 0.0
    %928 = vmatpush1.msra.mxu0 0.0
    %929 = vmatprep.subr.mxu0 0.0
    %930 = vmatpush1.msra.mxu0 0.0
    %931 = vmatprep.subr.mxu0 0.0
    %932 = vmatpush1.msra.mxu0 0.0
    %933 = vmatprep.subr.mxu0 0.0
    %934 = vmatpush1.msra.mxu0 0.0
    %935 = vmatprep.mubr.f32.mxu0 0.0
    %936 = vmatmul.mubr.f32.gmra.mrb[0].mxu0 %v869
    %v937 = vpop.f32.mrb[0].mxu0
    %v938 = vadd.f32 0.0, %v937
    %v939 = vpop.f32.mrb[0].mxu0
    %940 = vdwg.mxu0
    %v942 = vrot.slane %v938, 2
    %v944 = vadd.f32 %v134, %v942
    %v945 = vmul.f32 %v944, %v142
    %v946 = vtanh.pop %v945
    %v947 = vmul.f32 %v946, 0.5
    %v948 = vadd.f32 %v947, 0.5
    %v949 = vsel %vm141, %v946, %v948
    %v951 = vrot.slane %v858, 6
    %v953 = vmul.f32 %v949, %v951
    %955 = vrot.lane.b32.xlu0 %v949, 64
    %v956 = vpop.permute.xlu0 %955
    %v958 = vmul.f32 %v949, %v956
    %960 = vrot.lane.b32.xlu0 %v958, 32
    %v961 = vpop.permute.xlu0 %960
    %v963 = vadd.f32 %v953, %v961
    %v964 = vtanh.pop %v963
    %966 = vrot.lane.b32.xlu0 %v964, 64
    %v967 = vpop.permute.xlu0 %966
    %v969 = vmul.f32 %v949, %v967
    %v970 = vlaneseq
    %v971 = vshrl.u32 %v970, 7
    %v972 = vsub.s32 0, %v971
    %v973 = vrot.slane %v47, %v972
    %975 = vrot.lane.b32.xlu0 %v973, 96
    %v976 = vpop.permute.xlu0 %975
    %v978 = vmul.f32 %v969, %v976
    %980 = vrot.lane.b32.xlu0 %v978, 32
    %v981 = vpop.permute.xlu0 %980
    %vm983 = vcmask 261126
    %v984 = vsel %vm983, %v981, 0.0
    %985 = vadd.xlane.f32.xlu0 %v984
    %v986 = vpop.xlane.xlu0 %985
    %v987 = vlaneseq
    %v988 = vshrl.u32 %v987, 7
    %v989 = vsub.s32 0, %v988
    %v990 = vrot.slane %v48, %v989
    %v991 = vadd.f32 %v986, %v990
    %vm992 = vcmask 7174
    %993 = vst.msk [vmem:[%s2 - $0x6] sm:$0xc0] %vm992, %v991
    // Predicated region
    $region18: #{tpu_custom_call.1} parent=1 // pred_check
      _
    $region19: #{tpu_custom_call.1} parent=1 // pred_check_branch
      %995 = sbr.rel (0) target = $region21
    $region20: #{tpu_custom_call.1} parent=1 // pred_region
      _
    $region21: #{tpu_custom_call.1} parent=1 // pred_fallthru
      _
    // Predicated region
    $region22: #{tpu_custom_call.1} parent=1 // pred_check
      _
    $region23: #{tpu_custom_call.1} parent=1 // pred_check_branch
      %997 = sbr.rel (0) target = $region25
    $region24: #{tpu_custom_call.1} parent=1 // pred_region
      _
    $region25: #{tpu_custom_call.1} parent=1 // pred_fallthru
      _
    %998 = vsyncpa [#allocation3], 1
    %999 = vsyncpa [#allocation5], 1

</llo_original>
